<compile_context>
chip_gen: v7x
topology: tpu7x:2x2x1
jax: 0.10.0
libtpu: 0.0.40
codegen_flags: <defaults>
</compile_context>

<pallas_src>
import functools

import jax
import jax.numpy as jnp
from jax import lax
from jax.experimental import pallas as pl
from jax.experimental.pallas import tpu as pltpu


def _round_up(x, m):
    return ((x + m - 1) // m) * m


def _vmem_capacity_bytes():
    """Best-effort physical VMEM capacity query (bytes)."""
    try:
        cap = int(getattr(pltpu.get_tpu_info(), "vmem_capacity_bytes", 0))
        if cap > 0:
            return cap
    except Exception:
        pass
    try:
        kind = jax.devices()[0].device_kind.lower()
        if "v7" in kind:
            return 64 << 20
        return 128 << 20
    except Exception:
        pass
    return 64 << 20  # conservative default


def _vmem_params():
    """(tile live-footprint budget, vmem_limit_bytes) per TPU generation."""
    cap = _vmem_capacity_bytes()
    if cap >= (100 << 20):          # v5e / v6e class: 128 MiB VMEM
        return 56 << 20, 96 << 20
    return 22 << 20, 40 << 20       # v7x class: 64 MiB VMEM


def _grid_semantics():
    """Use CORE_PARALLEL on multi-TensorCore (v7x) parts, else 'parallel'."""
    sem = "parallel"
    try:
        kind = jax.devices()[0].device_kind.lower()
        if "v7" in kind and hasattr(pltpu, "CORE_PARALLEL"):
            sem = pltpu.CORE_PARALLEL
    except Exception:
        pass
    return (sem,)


def _auto_tile_n(n_rows, n_classes, in_itemsize, vmem_budget_bytes):
    """Row-tile size: big enough to amortize per-step overhead, small enough
    to keep the (lane-padded) live VMEM footprint under budget."""
    # Lane padding: a (tile_n, C) block occupies >= 128 lanes per vreg row.
    c_pad = _round_up(max(n_classes, 128), 128)
    # Target >= ~2 MiB of logits HBM traffic per grid step (~0.35 us step
    # overhead amortization), with a 1024-row floor for larger C.
    min_rows_for_bytes = pl.cdiv(2 << 20, max(1, n_classes * in_itemsize))
    want = max(int(min_rows_for_bytes), 1024)
    # Live VMEM per row:
    #   double-buffered logits tile (lane-padded)
    # + double-buffered int32 target column (padded to 128 lanes)
    # + double-buffered f32 output column (padded to 128 lanes; 'none' path)
    # + ~5 live (tile_n, c_pad) f32 temps inside the kernel body.
    per_row = (2 * c_pad * in_itemsize
               + 2 * 128 * 4
               + 2 * 128 * 4
               + 5 * c_pad * 4)
    cap = max(16, (vmem_budget_bytes // per_row) // 16 * 16)
    tile = min(want, cap, _round_up(n_rows, 16))
    return max(16, (tile // 16) * 16)


def _focal_kernel(*refs, gamma, n_valid, tile_n, do_reduce, alpha_mode,
                  alpha_scalar, needs_mask):
    if alpha_mode == 'vector':
        alpha_ref, x_ref, t_ref, out_ref = refs
    else:
        x_ref, t_ref, out_ref = refs
        alpha_ref = None

    pid = pl.program_id(0)

    x = x_ref[...].astype(jnp.float32)          # (TN, C)
    t = t_ref[...]                              # (TN, 1) int32

    # --- log-sum-exp over classes (dim=1 / lane axis) ---
    m = jnp.max(x, axis=1, keepdims=True)
    lse = m + jnp.log(jnp.sum(jnp.exp(x - m), axis=1, keepdims=True))

    # --- gather target logit via one-hot mask; logpt on the column only ---
    col = lax.broadcasted_iota(jnp.int32, x.shape, 1)
    onehot = col == t                           # (TN, C) bool
    x_t = jnp.sum(jnp.where(onehot, x, 0.0), axis=1, keepdims=True)
    logpt = x_t - lse                           # (TN, 1)
    pt = jnp.exp(logpt)                         # (TN, 1)

    # --- alpha weighting (static mode: none / scalar / per-class vector) ---
    if alpha_mode == 'vector':
        alpha = alpha_ref[...].astype(jnp.float32)      # (1, C)
        a = jnp.sum(jnp.where(onehot, alpha, 0.0), axis=1, keepdims=True)
        logpt = a * logpt
    elif alpha_mode == 'scalar':
        logpt = jnp.float32(alpha_scalar) * logpt

    # --- focal weight: integer gamma -> pure VPU multiplies (no pow) ---
    one_minus_pt = jnp.maximum(1.0 - pt, 0.0)   # clamp: NaN guard for pow
    g = float(gamma)
    if g == int(g) and 0 <= int(g) <= 4:
        w = jnp.ones_like(one_minus_pt)
        for _ in range(int(g)):
            w = w * one_minus_pt
    else:
        w = one_minus_pt ** g
    loss = -1.0 * w * logpt                     # (TN, 1)

    # --- neutralize rows beyond N (ragged last block only) ---
    if needs_mask:
        row = pid * tile_n + lax.broadcasted_iota(jnp.int32, (tile_n, 1), 0)
        loss = jnp.where(row < n_valid, loss, 0.0)

    if do_reduce:
        # one partial sum per grid step; final sum / mean in the wrapper
        out_ref[...] = jnp.broadcast_to(jnp.sum(loss), (1, 1, 1))
    else:
        out_ref[...] = loss


def focal_loss(logits, target, alpha=None, gamma=2, reduction='mean',
               tile_n=None):
    """Pallas TPU FocalLoss forward. logits: (N, C), target: (N,) int."""
    N, C = logits.shape

    # static alpha mode
    if alpha is None:
        alpha_mode, alpha_scalar, alpha_vec = 'none', 0.0, None
    elif isinstance(alpha, (list, tuple)):
        alpha_mode, alpha_scalar = 'vector', 0.0
        alpha_vec = jnp.asarray(alpha, jnp.float32).reshape(1, C)
    else:
        alpha_mode, alpha_scalar, alpha_vec = 'scalar', float(alpha), None

    t = target.astype(jnp.int32).reshape(-1, 1)

    vmem_budget, vmem_limit = _vmem_params()
    in_itemsize = logits.dtype.itemsize
    if tile_n is None:
        tile_n = _auto_tile_n(N, C, in_itemsize, vmem_budget)
    tile_n = max(16, _round_up(int(tile_n), 16))
    tile_n = min(tile_n, _round_up(N, 16))

    num_tiles = pl.cdiv(N, tile_n)
    do_reduce = reduction in ('mean', 'sum')
    needs_mask = (N % tile_n) != 0

    kernel = functools.partial(
        _focal_kernel, gamma=gamma, n_valid=N, tile_n=tile_n,
        do_reduce=do_reduce, alpha_mode=alpha_mode, alpha_scalar=alpha_scalar,
        needs_mask=needs_mask)

    in_specs = []
    call_args = []
    if alpha_mode == 'vector':
        in_specs.append(pl.BlockSpec((1, C), lambda i: (0, 0)))   # broadcast
        call_args.append(alpha_vec)
    in_specs.append(pl.BlockSpec((tile_n, C), lambda i: (i, 0)))  # logits
    in_specs.append(pl.BlockSpec((tile_n, 1), lambda i: (i, 0)))  # targets
    call_args.extend([logits, t])

    if do_reduce:
        out_shape = jax.ShapeDtypeStruct((num_tiles, 1, 1), jnp.float32)
        out_specs = pl.BlockSpec((1, 1, 1), lambda i: (i, 0, 0))
    else:
        out_shape = jax.ShapeDtypeStruct((N, 1), jnp.float32)
        out_specs = pl.BlockSpec((tile_n, 1), lambda i: (i, 0))

    out = pl.pallas_call(
        kernel,
        out_shape=out_shape,
        grid_spec=pltpu.PrefetchScalarGridSpec(
            num_scalar_prefetch=0,
            grid=(num_tiles,),
            in_specs=in_specs,
            out_specs=out_specs,
        ),
        compiler_params=pltpu.CompilerParams(
            dimension_semantics=_grid_semantics(),
            vmem_limit_bytes=vmem_limit,
        ),
    )(*call_args)

    if do_reduce:
        total = jnp.sum(out)
        if reduction == 'mean':
            return total / jnp.float32(N)
        return total
    return out[:, 0]        # matches PyTorch .squeeze() -> shape (N,)


def _focal_loss_ref(logits, target, alpha=None, gamma=2, reduction='mean'):
    """Pure-JAX reference mirroring the PyTorch forward."""
    logp = jax.nn.log_softmax(logits.astype(jnp.float32), axis=1)
    pt_all = jnp.exp(logp)
    logpt = jnp.take_along_axis(logp, target[:, None], axis=1)[:, 0]
    pt = jnp.take_along_axis(pt_all, target[:, None], axis=1)[:, 0]
    if alpha is not None:
        if isinstance(alpha, (list, tuple)):
            a = jnp.asarray(alpha, jnp.float32)[target]
        else:
            a = alpha
        logpt = a * logpt
    loss = -1.0 * (1.0 - pt) ** gamma * logpt
    if reduction == 'mean':
        return loss.mean()
    if reduction == 'sum':
        return loss.sum()
    return loss


if __name__ == "__main__":
    key = jax.random.PRNGKey(0)
    k1, k2, k3, k4 = jax.random.split(key, 4)

    # 1) Default FocalLoss config: alpha=None (no alpha input at all),
    #    gamma=2, reduction='mean', auto tile (single block).
    N, C = 64, 16
    logits = jax.random.normal(k1, (N, C), dtype=jnp.float32)
    target = jax.random.randint(k2, (N,), 0, C, dtype=jnp.int32)

    out = jax.block_until_ready(focal_loss(logits, target))
    ref = _focal_loss_ref(logits, target)
    assert jnp.allclose(out, ref, rtol=1e-5, atol=1e-5), (out, ref)

    # 2) Per-class alpha list + reduction='sum'.
    alpha_list = [0.25 + 0.05 * i for i in range(C)]
    out2 = jax.block_until_ready(
        focal_loss(logits, target, alpha=alpha_list, gamma=2, reduction='sum'))
    ref2 = _focal_loss_ref(logits, target, alpha=alpha_list, gamma=2,
                           reduction='sum')
    assert jnp.allclose(out2, ref2, rtol=1e-4, atol=1e-4), (out2, ref2)

    # 3) Ragged N (last block masked), scalar alpha (baked constant),
    #    integer gamma=3, reduction='none', multi-tile grid.
    N2 = 200
    logits2 = jax.random.normal(k3, (N2, C), dtype=jnp.float32)
    target2 = jax.random.randint(k4, (N2,), 0, C, dtype=jnp.int32)
    out3 = jax.block_until_ready(
        focal_loss(logits2, target2, alpha=0.5, gamma=3, reduction='none',
                   tile_n=128))
    ref3 = _focal_loss_ref(logits2, target2, alpha=0.5, gamma=3,
                           reduction='none')
    assert out3.shape == (N2,)
    assert jnp.allclose(out3, ref3, rtol=1e-4, atol=1e-5), (out3, ref3)

    # 4) Ragged N, multiple per-block partial sums, bf16 passthrough, 'mean'.
    out4 = jax.block_until_ready(
        focal_loss(logits2.astype(jnp.bfloat16), target2, reduction='mean',
                   tile_n=64))
    ref4 = _focal_loss_ref(logits2.astype(jnp.bfloat16), target2,
                           reduction='mean')
    assert jnp.allclose(out4, ref4, rtol=1e-3, atol=1e-3), (out4, ref4)

    # 5) Non-integer gamma (pow path), reduction='sum'.
    out5 = jax.block_until_ready(
        focal_loss(logits2, target2, gamma=2.5, reduction='sum', tile_n=96))
    ref5 = _focal_loss_ref(logits2, target2, gamma=2.5, reduction='sum')
    assert jnp.allclose(out5, ref5, rtol=1e-4, atol=1e-4), (out5, ref5)

    print("KERNEL_OK")
</pallas_src>

<mosaic_0001>
module attributes {stable_mosaic.version = 11 : i64} {
  func.func @_focal_kernel(%arg0: i32, %arg1: memref<64x16xf32, #tpu.memory_space<vmem>>, %arg2: memref<64x1xi32, #tpu.memory_space<vmem>>, %arg3: memref<1x1x1xf32, #tpu.memory_space<vmem>>) attributes {dimension_semantics = [#tpu.dimension_semantics<parallel>], iteration_bounds = array<i64: 1>, scalar_prefetch = 0 : i64, scratch_operands = 0 : i64, tpu.core_type = #tpu.core_type<tc>, window_params = [{transform_indices = @transform_0, window_bounds = array<i64: 64, 16>}, {transform_indices = @transform_1, window_bounds = array<i64: 64, 1>}, {transform_indices = @transform_2, window_bounds = array<i64: 1, 1, 1>}]} {
    %c0 = arith.constant 0 : index
    %c0_0 = arith.constant 0 : index
    %0 = vector.load %arg1[%c0, %c0_0] : memref<64x16xf32, #tpu.memory_space<vmem>>, vector<64x16xf32>
    %c0_1 = arith.constant 0 : index
    %c0_2 = arith.constant 0 : index
    %1 = vector.load %arg2[%c0_1, %c0_2] : memref<64x1xi32, #tpu.memory_space<vmem>>, vector<64x1xi32>
    %cst = arith.constant dense<0xFF800000> : vector<64xf32>
    %2 = vector.multi_reduction <maximumf>, %0, %cst [1] : vector<64x16xf32> to vector<64xf32>
    %3 = vector.shape_cast %2 : vector<64xf32> to vector<64x1xf32>
    %4 = vector.broadcast %3 : vector<64x1xf32> to vector<64x16xf32>
    %5 = arith.subf %0, %4 : vector<64x16xf32>
    %6 = math.exp %5 : vector<64x16xf32>
    %cst_3 = arith.constant dense<0.000000e+00> : vector<64xf32>
    %7 = vector.multi_reduction <add>, %6, %cst_3 [1] : vector<64x16xf32> to vector<64xf32>
    %8 = vector.shape_cast %7 : vector<64xf32> to vector<64x1xf32>
    %9 = math.log %8 : vector<64x1xf32>
    %10 = arith.addf %3, %9 : vector<64x1xf32>
    %11 = tpu.iota {dimensions = array<i32: 1>} : vector<64x16xi32>
    %12 = vector.broadcast %1 : vector<64x1xi32> to vector<64x16xi32>
    %13 = arith.cmpi eq, %11, %12 : vector<64x16xi32>
    %cst_4 = arith.constant 0.000000e+00 : f32
    %14 = vector.broadcast %cst_4 : f32 to vector<64x16xf32>
    %15 = arith.select %13, %0, %14 : vector<64x16xi1>, vector<64x16xf32>
    %cst_5 = arith.constant dense<0.000000e+00> : vector<64xf32>
    %16 = vector.multi_reduction <add>, %15, %cst_5 [1] : vector<64x16xf32> to vector<64xf32>
    %17 = vector.shape_cast %16 : vector<64xf32> to vector<64x1xf32>
    %18 = arith.subf %17, %10 : vector<64x1xf32>
    %19 = math.exp %18 : vector<64x1xf32>
    %cst_6 = arith.constant 1.000000e+00 : f32
    %20 = vector.broadcast %cst_6 : f32 to vector<64x1xf32>
    %21 = arith.subf %20, %19 : vector<64x1xf32>
    %cst_7 = arith.constant 0.000000e+00 : f32
    %22 = vector.broadcast %cst_7 : f32 to vector<64x1xf32>
    %23 = arith.maximumf %21, %22 : vector<64x1xf32>
    %cst_8 = arith.constant 1.000000e+00 : f32
    %24 = vector.broadcast %cst_8 : f32 to vector<64x1xf32>
    %25 = arith.mulf %24, %23 : vector<64x1xf32>
    %26 = arith.mulf %25, %23 : vector<64x1xf32>
    %cst_9 = arith.constant -1.000000e+00 : f32
    %27 = vector.broadcast %cst_9 : f32 to vector<64x1xf32>
    %28 = arith.mulf %27, %26 : vector<64x1xf32>
    %29 = arith.mulf %28, %18 : vector<64x1xf32>
    %30 = vector.shape_cast %29 : vector<64x1xf32> to vector<1x64x1xf32>
    %cst_10 = arith.constant dense<0.000000e+00> : vector<1xf32>
    %31 = vector.multi_reduction <add>, %30, %cst_10 [1, 2] : vector<1x64x1xf32> to vector<1xf32>
    %32 = vector.shape_cast %31 : vector<1xf32> to vector<1x1x1xf32>
    %33 = vector.extract %32[0, 0, 0] : f32 from vector<1x1x1xf32>
    %34 = vector.broadcast %33 : f32 to vector<1x1x1xf32>
    %c0_11 = arith.constant 0 : index
    %c0_12 = arith.constant 0 : index
    %c0_13 = arith.constant 0 : index
    %35 = vector.load %arg3[%c0_11, %c0_12, %c0_13] : memref<1x1x1xf32, #tpu.memory_space<vmem>>, vector<1x1x1xf32>
    tpu.vector_store %arg3[%c0_11, %c0_12, %c0_13], %34 {strides = array<i32>} : memref<1x1x1xf32, #tpu.memory_space<vmem>>, vector<1x1x1xf32>,
    return
  }
  func.func @transform_0(%arg0: i32) -> (i32, i32) {
    %c0_i32 = arith.constant 0 : i32
    %c0_i32_0 = arith.constant 0 : i32
    return %arg0, %c0_i32 : i32, i32
  }
  func.func @transform_1(%arg0: i32) -> (i32, i32) {
    %c0_i32 = arith.constant 0 : i32
    %c0_i32_0 = arith.constant 0 : i32
    return %arg0, %c0_i32 : i32, i32
  }
  func.func @transform_2(%arg0: i32) -> (i32, i32, i32) {
    %c0_i32 = arith.constant 0 : i32
    %c0_i32_0 = arith.constant 0 : i32
    %c0_i32_1 = arith.constant 0 : i32
    return %arg0, %c0_i32, %c0_i32_0 : i32, i32, i32
  }
}

</mosaic_0001>

<llo_original>
// kernel: tpu_custom_call.1
$region0: #{tpu_custom_call.1}
  #allocation0 [shape = 'u32[]', space=smem, size = 0x4, offset = 0x4, fixed_abs, tag = 'smem constant byte address 0x4 - core index']
  #allocation1 [shape = 'u32[144,128]{1,0:T(1,128)}', space=vmem, size = 0x12000, scoped, tag = 'internal scratch']
  %s0 = inlined_call_operand.hbm [shape: f32[64,16], index: 0, kind: input, shape index: {}]
  %s1 = inlined_call_operand.hbm [shape: s32[64,1], index: 1, kind: input, shape index: {}]
  %s2 = inlined_call_operand.hbm [shape: f32[1,1,1], index: 2, kind: output, shape index: {}]
  %s3 = sld [smem:[#allocation0]]
  $region26: #{tpu_custom_call.1} parent=0
    _
  %s5 = ssub.s32 1, %s3
  %s6 = scalar_select 0, %s5, %s3
  $region1: #{tpu_custom_call.1} parent=0
    #allocation2 [shape = 'u8[32768]{0}', space=vmem, size = 0x8000, scoped, tag = 'input window, operand 0, single buffered']
    #allocation3 [shape = 's32[1]{0}', space=sflag, size = 0x4, scoped, tag = 'scoped memory for tpu_custom_call.1']
    #allocation4 [shape = 's32[1]{0}', space=sflag, size = 0x4, scoped, tag = 'scoped memory for tpu_custom_call.1']
    #allocation5 [shape = 'u8[32768]{0}', space=vmem, size = 0x8000, scoped, tag = 'input window, operand 1, single buffered']
    #allocation6 [shape = 's32[1]{0}', space=sflag, size = 0x4, scoped, tag = 'scoped memory for tpu_custom_call.1']
    #allocation7 [shape = 'u8[512]{0}', space=vmem, size = 0x400, scoped, tag = 'output window, operand 0, single buffered']
    %7 = vsyncpa [#allocation3], 0
    %8 = vsyncpa [#allocation6], 0
    %9 = vsyncpa [#allocation4], 0
    // Predicated region
    $region2: #{tpu_custom_call.1} parent=1 // pred_check
      _
    $region3: #{tpu_custom_call.1} parent=1 // pred_check_branch
      %11 = sbr.rel (0) target = $region5
    $region4: #{tpu_custom_call.1} parent=1 // pred_region
      %s13 = ssub.s32 1024, 1024
      %14 = vsyncadd [#allocation3], %s13
      %s15 = sshll.u32 [#allocation2], 4
      %s16 = int_to_ptr.vmem [resolvable:$true] %s15
      %21 = dma.hbm_to_vmem [thread:$0]  %s0, 1024, %s16, [#allocation3], 128, 128, 8
    $region5: #{tpu_custom_call.1} parent=1 // pred_fallthru
      _
    // Predicated region
    $region6: #{tpu_custom_call.1} parent=1 // pred_check
      _
    $region7: #{tpu_custom_call.1} parent=1 // pred_check_branch
      %23 = sbr.rel (0) target = $region9
    $region8: #{tpu_custom_call.1} parent=1 // pred_region
      %s25 = ssub.s32 1024, 1024
      %26 = vsyncadd [#allocation6], %s25
      %s27 = sshll.u32 [#allocation5], 4
      %s28 = int_to_ptr.vmem [resolvable:$true] %s27
      %33 = dma.hbm_to_vmem [thread:$0]  %s1, 1024, %s28, [#allocation6], 128, 128, 8
    $region9: #{tpu_custom_call.1} parent=1 // pred_fallthru
      _
    // Predicated region
    $region10: #{tpu_custom_call.1} parent=1 // pred_check
      _
    $region11: #{tpu_custom_call.1} parent=1 // pred_check_branch
      %35 = sbr.rel (0) target = $region13
    $region12: #{tpu_custom_call.1} parent=1 // pred_region
      %36 = dma.done [#allocation3], 1024
    $region13: #{tpu_custom_call.1} parent=1 // pred_fallthru
      _
    // Predicated region
    $region14: #{tpu_custom_call.1} parent=1 // pred_check
      _
    $region15: #{tpu_custom_call.1} parent=1 // pred_check_branch
      %38 = sbr.rel (0) target = $region17
    $region16: #{tpu_custom_call.1} parent=1 // pred_region
      %39 = dma.done [#allocation6], 1024
    $region17: #{tpu_custom_call.1} parent=1 // pred_fallthru
      _
    %v40 = vld [vmem:[#allocation2] sm:$0xff]
    %v41 = vld [vmem:[#allocation2 + $0x8] sm:$0xff]
    %v42 = vld [vmem:[#allocation2 + $0x10] sm:$0xff]
    %v43 = vld [vmem:[#allocation2 + $0x18] sm:$0xff]
    %v44 = vld [vmem:[#allocation2 + $0x20] sm:$0xff]
    %v45 = vld [vmem:[#allocation2 + $0x28] sm:$0xff]
    %v46 = vld [vmem:[#allocation2 + $0x30] sm:$0xff]
    %v47 = vld [vmem:[#allocation2 + $0x38] sm:$0xff]
    %v48 = vld [vmem:[#allocation5] sm:$0xff]
    %v49 = vld [vmem:[#allocation5 + $0x8] sm:$0xff]
    %v50 = vld [vmem:[#allocation5 + $0x10] sm:$0xff]
    %v51 = vld [vmem:[#allocation5 + $0x18] sm:$0xff]
    %v52 = vld [vmem:[#allocation5 + $0x20] sm:$0xff]
    %v53 = vld [vmem:[#allocation5 + $0x28] sm:$0xff]
    %v54 = vld [vmem:[#allocation5 + $0x30] sm:$0xff]
    %v55 = vld [vmem:[#allocation5 + $0x38] sm:$0xff]
    %vm56 = vcmask 130048
    %v57 = vsel %vm56, %v40, -inf
    %58 = vmax.xlane.f32.xlu0 %v57
    %v59 = vpop.xlane.xlu0 %58
    %v60 = vsel %vm56, %v41, -inf
    %61 = vmax.xlane.f32.xlu0 %v60
    %v62 = vpop.xlane.xlu0 %61
    %v63 = vsel %vm56, %v42, -inf
    %64 = vmax.xlane.f32.xlu0 %v63
    %v65 = vpop.xlane.xlu0 %64
    %v66 = vsel %vm56, %v43, -inf
    %67 = vmax.xlane.f32.xlu0 %v66
    %v68 = vpop.xlane.xlu0 %67
    %v69 = vsel %vm56, %v44, -inf
    %70 = vmax.xlane.f32.xlu0 %v69
    %v71 = vpop.xlane.xlu0 %70
    %v72 = vsel %vm56, %v45, -inf
    %73 = vmax.xlane.f32.xlu0 %v72
    %v74 = vpop.xlane.xlu0 %73
    %v75 = vsel %vm56, %v46, -inf
    %76 = vmax.xlane.f32.xlu0 %v75
    %v77 = vpop.xlane.xlu0 %76
    %v78 = vsel %vm56, %v47, -inf
    %79 = vmax.xlane.f32.xlu0 %v78
    %v80 = vpop.xlane.xlu0 %79
    %v81 = vsub.f32 %v40, %v59
    %v82 = vsub.f32 %v41, %v62
    %v83 = vsub.f32 %v42, %v65
    %v84 = vsub.f32 %v43, %v68
    %v85 = vsub.f32 %v44, %v71
    %v86 = vsub.f32 %v45, %v74
    %v87 = vsub.f32 %v46, %v77
    %v88 = vsub.f32 %v47, %v80
    %v89 = vmul.f32 %v81, 1.442695
    %v90 = vpow.pop %v89
    %v91 = vmul.f32 %v82, 1.442695
    %v92 = vpow.pop %v91
    %v93 = vmul.f32 %v83, 1.442695
    %v94 = vpow.pop %v93
    %v95 = vmul.f32 %v84, 1.442695
    %v96 = vpow.pop %v95
    %v97 = vmul.f32 %v85, 1.442695
    %v98 = vpow.pop %v97
    %v99 = vmul.f32 %v86, 1.442695
    %v100 = vpow.pop %v99
    %v101 = vmul.f32 %v87, 1.442695
    %v102 = vpow.pop %v101
    %v103 = vmul.f32 %v88, 1.442695
    %v104 = vpow.pop %v103
    %v105 = vsel %vm56, %v90, 0.0
    %106 = vadd.xlane.f32.xlu0 %v105
    %v107 = vpop.xlane.xlu0 %106
    %v108 = vsel %vm56, %v92, 0.0
    %109 = vadd.xlane.f32.xlu0 %v108
    %v110 = vpop.xlane.xlu0 %109
    %v111 = vsel %vm56, %v94, 0.0
    %112 = vadd.xlane.f32.xlu0 %v111
    %v113 = vpop.xlane.xlu0 %112
    %v114 = vsel %vm56, %v96, 0.0
    %115 = vadd.xlane.f32.xlu0 %v114
    %v116 = vpop.xlane.xlu0 %115
    %v117 = vsel %vm56, %v98, 0.0
    %118 = vadd.xlane.f32.xlu0 %v117
    %v119 = vpop.xlane.xlu0 %118
    %v120 = vsel %vm56, %v100, 0.0
    %121 = vadd.xlane.f32.xlu0 %v120
    %v122 = vpop.xlane.xlu0 %121
    %v123 = vsel %vm56, %v102, 0.0
    %124 = vadd.xlane.f32.xlu0 %v123
    %v125 = vpop.xlane.xlu0 %124
    %v126 = vsel %vm56, %v104, 0.0
    %127 = vadd.xlane.f32.xlu0 %v126
    %v128 = vpop.xlane.xlu0 %127
    %v129 = vlog2.pop %v107
    %v130 = vmul.f32 %v129, 0.6931472
    %v131 = vlog2.pop %v110
    %v132 = vmul.f32 %v131, 0.6931472
    %v133 = vlog2.pop %v113
    %v134 = vmul.f32 %v133, 0.6931472
    %v135 = vlog2.pop %v116
    %v136 = vmul.f32 %v135, 0.6931472
    %v137 = vlog2.pop %v119
    %v138 = vmul.f32 %v137, 0.6931472
    %v139 = vlog2.pop %v122
    %v140 = vmul.f32 %v139, 0.6931472
    %v141 = vlog2.pop %v125
    %v142 = vmul.f32 %v141, 0.6931472
    %v143 = vlog2.pop %v128
    %v144 = vmul.f32 %v143, 0.6931472
    %v145 = vadd.f32 %v59, %v130
    %v146 = vadd.f32 %v62, %v132
    %v147 = vadd.f32 %v65, %v134
    %v148 = vadd.f32 %v68, %v136
    %v149 = vadd.f32 %v71, %v138
    %v150 = vadd.f32 %v74, %v140
    %v151 = vadd.f32 %v77, %v142
    %v152 = vadd.f32 %v80, %v144
    %v153 = vlaneseq
    %v154 = vand.u32 %v153, 127
    %155 = vset.pattern.permute.xlu0 0
    %156 = vperm.xlu0 %155, %v48
    %v157 = vpop.permute.xlu0 %156
    %158 = vset.pattern.permute.xlu0 0
    %159 = vperm.xlu0 %158, %v49
    %v160 = vpop.permute.xlu0 %159
    %161 = vset.pattern.permute.xlu0 0
    %162 = vperm.xlu0 %161, %v50
    %v163 = vpop.permute.xlu0 %162
    %164 = vset.pattern.permute.xlu0 0
    %165 = vperm.xlu0 %164, %v51
    %v166 = vpop.permute.xlu0 %165
    %167 = vset.pattern.permute.xlu0 0
    %168 = vperm.xlu0 %167, %v52
    %v169 = vpop.permute.xlu0 %168
    %170 = vset.pattern.permute.xlu0 0
    %171 = vperm.xlu0 %170, %v53
    %v172 = vpop.permute.xlu0 %171
    %173 = vset.pattern.permute.xlu0 0
    %174 = vperm.xlu0 %173, %v54
    %v175 = vpop.permute.xlu0 %174
    %176 = vset.pattern.permute.xlu0 0
    %177 = vperm.xlu0 %176, %v55
    %v178 = vpop.permute.xlu0 %177
    %vm179 = vcmp.eq.s32.totalorder %v154, %v157
    %vm180 = vcmp.eq.s32.totalorder %v154, %v160
    %vm181 = vcmp.eq.s32.totalorder %v154, %v163
    %vm182 = vcmp.eq.s32.totalorder %v154, %v166
    %vm183 = vcmp.eq.s32.totalorder %v154, %v169
    %vm184 = vcmp.eq.s32.totalorder %v154, %v172
    %vm185 = vcmp.eq.s32.totalorder %v154, %v175
    %vm186 = vcmp.eq.s32.totalorder %v154, %v178
    %v187 = vsel %vm179, %v40, 0.0
    %v188 = vsel %vm180, %v41, 0.0
    %v189 = vsel %vm181, %v42, 0.0
    %v190 = vsel %vm182, %v43, 0.0
    %v191 = vsel %vm183, %v44, 0.0
    %v192 = vsel %vm184, %v45, 0.0
    %v193 = vsel %vm185, %v46, 0.0
    %v194 = vsel %vm186, %v47, 0.0
    %v195 = vsel %vm56, %v187, 0.0
    %196 = vadd.xlane.f32.xlu0 %v195
    %v197 = vpop.xlane.xlu0 %196
    %v198 = vsel %vm56, %v188, 0.0
    %199 = vadd.xlane.f32.xlu0 %v198
    %v200 = vpop.xlane.xlu0 %199
    %v201 = vsel %vm56, %v189, 0.0
    %202 = vadd.xlane.f32.xlu0 %v201
    %v203 = vpop.xlane.xlu0 %202
    %v204 = vsel %vm56, %v190, 0.0
    %205 = vadd.xlane.f32.xlu0 %v204
    %v206 = vpop.xlane.xlu0 %205
    %v207 = vsel %vm56, %v191, 0.0
    %208 = vadd.xlane.f32.xlu0 %v207
    %v209 = vpop.xlane.xlu0 %208
    %v210 = vsel %vm56, %v192, 0.0
    %211 = vadd.xlane.f32.xlu0 %v210
    %v212 = vpop.xlane.xlu0 %211
    %v213 = vsel %vm56, %v193, 0.0
    %214 = vadd.xlane.f32.xlu0 %v213
    %v215 = vpop.xlane.xlu0 %214
    %v216 = vsel %vm56, %v194, 0.0
    %217 = vadd.xlane.f32.xlu0 %v216
    %v218 = vpop.xlane.xlu0 %217
    %v219 = vsub.f32 %v197, %v145
    %v220 = vsub.f32 %v200, %v146
    %v221 = vsub.f32 %v203, %v147
    %v222 = vsub.f32 %v206, %v148
    %v223 = vsub.f32 %v209, %v149
    %v224 = vsub.f32 %v212, %v150
    %v225 = vsub.f32 %v215, %v151
    %v226 = vsub.f32 %v218, %v152
    %v227 = vmul.f32 %v219, 1.442695
    %v228 = vpow.pop %v227
    %v229 = vmul.f32 %v220, 1.442695
    %v230 = vpow.pop %v229
    %v231 = vmul.f32 %v221, 1.442695
    %v232 = vpow.pop %v231
    %v233 = vmul.f32 %v222, 1.442695
    %v234 = vpow.pop %v233
    %v235 = vmul.f32 %v223, 1.442695
    %v236 = vpow.pop %v235
    %v237 = vmul.f32 %v224, 1.442695
    %v238 = vpow.pop %v237
    %v239 = vmul.f32 %v225, 1.442695
    %v240 = vpow.pop %v239
    %v241 = vmul.f32 %v226, 1.442695
    %v242 = vpow.pop %v241
    %v243 = vsub.f32 1.0, %v228
    %v244 = vsub.f32 1.0, %v230
    %v245 = vsub.f32 1.0, %v232
    %v246 = vsub.f32 1.0, %v234
    %v247 = vsub.f32 1.0, %v236
    %v248 = vsub.f32 1.0, %v238
    %v249 = vsub.f32 1.0, %v240
    %v250 = vsub.f32 1.0, %v242
    %v251 = vmax.f32 %v243, 0.0
    %v252 = vmax.f32 %v244, 0.0
    %v253 = vmax.f32 %v245, 0.0
    %v254 = vmax.f32 %v246, 0.0
    %v255 = vmax.f32 %v247, 0.0
    %v256 = vmax.f32 %v248, 0.0
    %v257 = vmax.f32 %v249, 0.0
    %v258 = vmax.f32 %v250, 0.0
    %v259 = vmul.f32 %v251, %v251
    %v260 = vmul.f32 %v252, %v252
    %v261 = vmul.f32 %v253, %v253
    %v262 = vmul.f32 %v254, %v254
    %v263 = vmul.f32 %v255, %v255
    %v264 = vmul.f32 %v256, %v256
    %v265 = vmul.f32 %v257, %v257
    %v266 = vmul.f32 %v258, %v258
    %v267 = vmul.f32 %v259, -1.0
    %v268 = vmul.f32 %v260, -1.0
    %v269 = vmul.f32 %v261, -1.0
    %v270 = vmul.f32 %v262, -1.0
    %v271 = vmul.f32 %v263, -1.0
    %v272 = vmul.f32 %v264, -1.0
    %v273 = vmul.f32 %v265, -1.0
    %v274 = vmul.f32 %v266, -1.0
    %v275 = vmul.f32 %v267, %v219
    %v276 = vmul.f32 %v268, %v220
    %v277 = vmul.f32 %v269, %v221
    %v278 = vmul.f32 %v270, %v222
    %v279 = vmul.f32 %v271, %v223
    %v280 = vmul.f32 %v272, %v224
    %v281 = vmul.f32 %v273, %v225
    %v282 = vmul.f32 %v274, %v226
    %vm283 = vcmask 7168
    %v284 = vsel %vm283, %v275, 0.0
    %v285 = vsel %vm283, %v276, 0.0
    %v286 = vadd.f32 %v284, %v285
    %v287 = vsel %vm283, %v277, 0.0
    %v288 = vadd.f32 %v286, %v287
    %v289 = vsel %vm283, %v278, 0.0
    %v290 = vadd.f32 %v288, %v289
    %v291 = vsel %vm283, %v279, 0.0
    %v292 = vadd.f32 %v290, %v291
    %v293 = vsel %vm283, %v280, 0.0
    %v294 = vadd.f32 %v292, %v293
    %v295 = vsel %vm283, %v281, 0.0
    %v296 = vadd.f32 %v294, %v295
    %v297 = vsel %vm283, %v282, 0.0
    %v298 = vadd.f32 %v296, %v297
    %299 = vadd.xlane.f32.xlu0 %v298
    %v300 = vpop.xlane.xlu0 %299
    %v301 = vrot.slane %v300, 4
    %v302 = vadd.f32 %v300, %v301
    %v303 = vrot.slane %v302, 2
    %v304 = vadd.f32 %v302, %v303
    %v305 = vrot.slane %v304, 1
    %v306 = vadd.f32 %v304, %v305
    %s307 = vtos %v306
    %v308 = vstv %s307
    %vm309 = vcmask 0
    %310 = vst.msk [vmem:[#allocation7] sm:$0x1] %vm309, %v308
    // Predicated region
    $region18: #{tpu_custom_call.1} parent=1 // pred_check
      _
    $region19: #{tpu_custom_call.1} parent=1 // pred_check_branch
      %312 = sbr.rel (0) target = $region21
    $region20: #{tpu_custom_call.1} parent=1 // pred_region
      %s314 = ssub.s32 16, 16
      %315 = vsyncadd [#allocation4], %s314
      %s317 = sshll.u32 [#allocation7], 4
      %s318 = int_to_ptr.vmem [resolvable:$true] %s317
      %320 = dma.vmem_to_hbm [thread:$0]  %s318, 16, %s2, [#allocation4]
    $region21: #{tpu_custom_call.1} parent=1 // pred_fallthru
      _
    // Predicated region
    $region22: #{tpu_custom_call.1} parent=1 // pred_check
      _
    $region23: #{tpu_custom_call.1} parent=1 // pred_check_branch
      %322 = sbr.rel (0) target = $region25
    $region24: #{tpu_custom_call.1} parent=1 // pred_region
      %323 = dma.done [#allocation4], 16
    $region25: #{tpu_custom_call.1} parent=1 // pred_fallthru
      _
    %324 = vsyncpa [#allocation3], 1
    %325 = vsyncpa [#allocation6], 1
    %326 = vsyncpa [#allocation4], 1

</llo_original>
